<compile_context>
chip_gen: v7x
topology: tpu7x:2x2x1
jax: 0.10.0
libtpu: 0.0.40
codegen_flags: <defaults>
</compile_context>

<pallas_src>
import functools

import jax
import jax.numpy as jnp
from jax import lax
from jax.experimental import pallas as pl
from jax.experimental.pallas import tpu as pltpu


def _ce_kernel(pred_ref, label_ref, loss_ref, *, ignore_index):
    """Per-pixel cross entropy, NCHW-native layout.

    pred_ref : (C, T)  logits  (classes on sublanes, pixels on lanes)
    label_ref: (1, T)  int32
    loss_ref : (1, T)  f32
    """
    x = pred_ref[...].astype(jnp.float32)                       # (C, T)
    lab = label_ref[...]                                        # (1, T)

    # numerically stable log-sum-exp over the class (sublane) axis
    m = jnp.max(x, axis=0, keepdims=True)                       # (1, T)
    xm = x - m
    sum_exp = jnp.sum(jnp.exp(xm), axis=0, keepdims=True)       # (1, T)

    # gather the (max-shifted) target logit via one-hot select over classes
    cls_idx = lax.broadcasted_iota(jnp.int32, x.shape, 0)       # (C, T)
    picked_m = jnp.sum(jnp.where(cls_idx == lab, xm, 0.0),
                       axis=0, keepdims=True)                   # (1, T)

    valid = lab != ignore_index
    loss_ref[...] = jnp.where(valid, jnp.log(sum_exp) - picked_m, 0.0)


def cross_entropy_loss_pallas(cls_score, label, *, reduction="mean",
                              loss_weight=1.0, ignore_index=255,
                              block_bytes=2 * 1024 * 1024):
    """Forward of CrossEntropyLoss (class_weight=None, weight=None, avg_factor=None).

    block_bytes: per-step f32 logits-block VMEM budget (Pallas double-buffers it);
    2 MiB keeps the kernel inside the default scoped VMEM on v5e (16 MiB) as well
    as v6e/v7x (32 MiB).  Sweepable.
    """
    # TODO(synk): class_weight / elementwise weight / avg_factor paths not wired
    # into the kernel (module defaults leave them None).
    n, c, h, w = cls_score.shape
    hw = h * w
    total = n * hw

    # NCHW-native views: pure reshapes, no transpose / extra HBM pass.
    pred = cls_score.reshape(n, c, hw)
    lab = label.reshape(n, 1, hw).astype(jnp.int32)

    # Lane-align H*W if needed.  Typical segmentation shapes have hw % 128 == 0,
    # so the logits copy from jnp.pad is normally avoided entirely.
    hw_pad = pl.cdiv(hw, 128) * 128
    if hw_pad != hw:
        pred = jnp.pad(pred, ((0, 0), (0, 0), (0, hw_pad - hw)))
        lab = jnp.pad(lab, ((0, 0), (0, 0), (0, hw_pad - hw)),
                      constant_values=ignore_index)

    # Largest lane tile (multiple of 128, dividing hw_pad) whose f32 logits
    # block fits the per-step VMEM budget.
    c_sub = max(8, pl.cdiv(c, 8) * 8)                  # sublane-padded classes
    max_tile = max(128, (block_bytes // (c_sub * 4)) // 128 * 128)
    tile_hw = min(hw_pad, max_tile)
    while hw_pad % tile_hw != 0:
        tile_hw -= 128

    grid = (n, hw_pad // tile_hw)
    kernel = functools.partial(_ce_kernel, ignore_index=ignore_index)

    loss_elem = pl.pallas_call(
        kernel,
        out_shape=jax.ShapeDtypeStruct((n, 1, hw_pad), jnp.float32),
        grid_spec=pltpu.PrefetchScalarGridSpec(
            num_scalar_prefetch=0,
            grid=grid,
            in_specs=[
                pl.BlockSpec((None, c, tile_hw), lambda b, j: (b, 0, j)),
                pl.BlockSpec((None, 1, tile_hw), lambda b, j: (b, 0, j)),
            ],
            out_specs=pl.BlockSpec((None, 1, tile_hw), lambda b, j: (b, 0, j)),
        ),
        compiler_params=pltpu.CompilerParams(
            dimension_semantics=("parallel", "parallel")),
    )(pred, lab)

    if reduction == "none":
        out = loss_elem[:, 0, :hw].reshape(n, h, w)
    elif reduction == "sum":
        out = jnp.sum(loss_elem)                       # padded lanes are exact 0
    else:  # 'mean': average over ALL elements (ignored pixels count as 0),
           # matching reduce_loss(..., 'mean') in the reference.
        out = jnp.sum(loss_elem) / jnp.float32(total)
    return loss_weight * out


if __name__ == "__main__":
    key = jax.random.PRNGKey(0)
    k1, k2, k3 = jax.random.split(key, 3)

    N, C, H, W = 2, 4, 16, 16
    cls_score = jax.random.normal(k1, (N, C, H, W), dtype=jnp.float32)
    label = jax.random.randint(k2, (N, H, W), 0, C, dtype=jnp.int32)
    # sprinkle some ignore_index (255) pixels
    ignore_mask = jax.random.uniform(k3, (N, H, W)) < 0.1
    label = jnp.where(ignore_mask, 255, label)

    loss_mean = cross_entropy_loss_pallas(cls_score, label, reduction="mean")
    loss_none = cross_entropy_loss_pallas(cls_score, label, reduction="none")
    jax.block_until_ready((loss_mean, loss_none))

    # pure-JAX reference check
    logp = jax.nn.log_softmax(
        jnp.transpose(cls_score, (0, 2, 3, 1)).astype(jnp.float32), axis=-1)
    lab_safe = jnp.where(label == 255, 0, label)
    nll = -jnp.take_along_axis(logp, lab_safe[..., None], axis=-1)[..., 0]
    nll = jnp.where(label == 255, 0.0, nll)

    assert jnp.allclose(loss_none, nll, rtol=1e-5, atol=1e-5)
    assert jnp.allclose(loss_mean, nll.mean(), rtol=1e-5, atol=1e-5), (loss_mean, nll.mean())
    print("KERNEL_OK")
</pallas_src>

<mosaic_0001>
module attributes {stable_mosaic.version = 11 : i64} {
  func.func @_ce_kernel(%arg0: i32, %arg1: i32, %arg2: memref<1x4x256xf32, #tpu.memory_space<vmem>>, %arg3: memref<1x1x256xi32, #tpu.memory_space<vmem>>, %arg4: memref<1x1x256xf32, #tpu.memory_space<vmem>>) attributes {dimension_semantics = [#tpu.dimension_semantics<parallel>, #tpu.dimension_semantics<parallel>], iteration_bounds = array<i64: 2, 1>, scalar_prefetch = 0 : i64, scratch_operands = 0 : i64, tpu.core_type = #tpu.core_type<tc>, window_params = [{transform_indices = @transform_0, window_bounds = array<i64: 1, 4, 256>}, {transform_indices = @transform_1, window_bounds = array<i64: 1, 1, 256>}, {transform_indices = @transform_2, window_bounds = array<i64: 1, 1, 256>}]} {
    %c0 = arith.constant 0 : index
    %c0_0 = arith.constant 0 : index
    %c0_1 = arith.constant 0 : index
    %0 = vector.load %arg2[%c0, %c0_0, %c0_1] : memref<1x4x256xf32, #tpu.memory_space<vmem>>, vector<1x4x256xf32>
    %1 = vector.shape_cast %0 : vector<1x4x256xf32> to vector<4x256xf32>
    %c0_2 = arith.constant 0 : index
    %c0_3 = arith.constant 0 : index
    %c0_4 = arith.constant 0 : index
    %2 = vector.load %arg3[%c0_2, %c0_3, %c0_4] : memref<1x1x256xi32, #tpu.memory_space<vmem>>, vector<1x1x256xi32>
    %3 = vector.shape_cast %2 : vector<1x1x256xi32> to vector<1x256xi32>
    %cst = arith.constant dense<0xFF800000> : vector<256xf32>
    %4 = vector.multi_reduction <maximumf>, %1, %cst [0] : vector<4x256xf32> to vector<256xf32>
    %5 = vector.shape_cast %4 : vector<256xf32> to vector<1x256xf32>
    %6 = vector.broadcast %5 : vector<1x256xf32> to vector<4x256xf32>
    %7 = arith.subf %1, %6 : vector<4x256xf32>
    %8 = math.exp %7 : vector<4x256xf32>
    %cst_5 = arith.constant dense<0.000000e+00> : vector<256xf32>
    %9 = vector.multi_reduction <add>, %8, %cst_5 [0] : vector<4x256xf32> to vector<256xf32>
    %10 = vector.shape_cast %9 : vector<256xf32> to vector<1x256xf32>
    %11 = tpu.iota {dimensions = array<i32: 0>} : vector<4x256xi32>
    %12 = vector.broadcast %3 : vector<1x256xi32> to vector<4x256xi32>
    %13 = arith.cmpi eq, %11, %12 : vector<4x256xi32>
    %cst_6 = arith.constant 0.000000e+00 : f32
    %14 = vector.broadcast %cst_6 : f32 to vector<4x256xf32>
    %15 = arith.select %13, %7, %14 : vector<4x256xi1>, vector<4x256xf32>
    %cst_7 = arith.constant dense<0.000000e+00> : vector<256xf32>
    %16 = vector.multi_reduction <add>, %15, %cst_7 [0] : vector<4x256xf32> to vector<256xf32>
    %17 = vector.shape_cast %16 : vector<256xf32> to vector<1x256xf32>
    %c255_i32 = arith.constant 255 : i32
    %18 = vector.broadcast %c255_i32 : i32 to vector<1x256xi32>
    %19 = arith.cmpi ne, %3, %18 : vector<1x256xi32>
    %20 = math.log %10 : vector<1x256xf32>
    %21 = arith.subf %20, %17 : vector<1x256xf32>
    %cst_8 = arith.constant 0.000000e+00 : f32
    %22 = vector.broadcast %cst_8 : f32 to vector<1x256xf32>
    %23 = arith.select %19, %21, %22 : vector<1x256xi1>, vector<1x256xf32>
    %c0_9 = arith.constant 0 : index
    %c0_10 = arith.constant 0 : index
    %c0_11 = arith.constant 0 : index
    %24 = vector.load %arg4[%c0_9, %c0_10, %c0_11] : memref<1x1x256xf32, #tpu.memory_space<vmem>>, vector<1x1x256xf32>
    %25 = vector.shape_cast %24 : vector<1x1x256xf32> to vector<1x256xf32>
    %26 = vector.shape_cast %23 : vector<1x256xf32> to vector<1x1x256xf32>
    tpu.vector_store %arg4[%c0_9, %c0_10, %c0_11], %26 {strides = array<i32>} : memref<1x1x256xf32, #tpu.memory_space<vmem>>, vector<1x1x256xf32>,
    return
  }
  func.func @transform_0(%arg0: i32, %arg1: i32) -> (i32, i32, i32) {
    %c0_i32 = arith.constant 0 : i32
    %c0_i32_0 = arith.constant 0 : i32
    return %arg0, %c0_i32, %arg1 : i32, i32, i32
  }
  func.func @transform_1(%arg0: i32, %arg1: i32) -> (i32, i32, i32) {
    %c0_i32 = arith.constant 0 : i32
    %c0_i32_0 = arith.constant 0 : i32
    return %arg0, %c0_i32, %arg1 : i32, i32, i32
  }
  func.func @transform_2(%arg0: i32, %arg1: i32) -> (i32, i32, i32) {
    %c0_i32 = arith.constant 0 : i32
    %c0_i32_0 = arith.constant 0 : i32
    return %arg0, %c0_i32, %arg1 : i32, i32, i32
  }
}

</mosaic_0001>

<llo_original>
// kernel: tpu_custom_call.1
$region0: #{tpu_custom_call.1}
  #allocation0 [shape = 'u32[]', space=smem, size = 0x4, offset = 0x4, fixed_abs, tag = 'smem constant byte address 0x4 - core index']
  #allocation1 [shape = 'u32[144,128]{1,0:T(1,128)}', space=vmem, size = 0x12000, scoped, tag = 'internal scratch']
  %s0 = inlined_call_operand.hbm [shape: f32[2,4,256], index: 0, kind: input, shape index: {}]
  %s1 = inlined_call_operand.hbm [shape: s32[2,1,256], index: 1, kind: input, shape index: {}]
  %s2 = inlined_call_operand.hbm [shape: f32[2,1,256], index: 2, kind: output, shape index: {}]
  %s3 = sld [smem:[#allocation0]]
  $region49: #{tpu_custom_call.1} parent=0
    _
  %s5 = ssub.s32 1, %s3
  %s6 = scalar_select 0, %s5, %s3
  $region1: #{tpu_custom_call.1} parent=0
    #allocation2 [shape = 'u8[8192]{0}', space=vmem, size = 0x2000, scoped, tag = 'input window, operand 0']
    #allocation3 [shape = 's32[2]{0}', space=sflag, size = 0x8, scoped, tag = 'scoped memory for tpu_custom_call.1']
    #allocation4 [shape = 's32[2]{0}', space=sflag, size = 0x8, scoped, tag = 'scoped memory for tpu_custom_call.1']
    #allocation5 [shape = 'u8[2048]{0}', space=vmem, size = 0x800, scoped, tag = 'input window, operand 1']
    #allocation6 [shape = 's32[2]{0}', space=sflag, size = 0x8, scoped, tag = 'scoped memory for tpu_custom_call.1']
    #allocation7 [shape = 'u8[2048]{0}', space=vmem, size = 0x800, scoped, tag = 'output window, operand 0']
    %7 = vsyncpa [#allocation3], 0
    %s8 = scalar_lea.sflag [#allocation3], 1
    %9 = vsyncpa %s8, 0
    %10 = vsyncpa [#allocation6], 0
    %s11 = scalar_lea.sflag [#allocation6], 1
    %12 = vsyncpa %s11, 0
    %13 = vsyncpa [#allocation4], 0
    %s14 = scalar_lea.sflag [#allocation4], 1
    %15 = vsyncpa %s14, 0
    loop: start=0, step=1, limit=4
    $region2: #{tpu_custom_call.1} parent=1 // loop_pre_header
      _
    $region3: #{tpu_custom_call.1} parent=1 // loop_header
      %s17 = sphi 0, %s21
      %p18 = scmp.ge.s32.totalorder %s17, 4
      %s24 = sphi 0, %s36
      %s25 = sphi 0, %s32
      %s26 = sphi 0, %s24
      %s27 = sphi 0, %s25
      %s28 = sphi 0, %s26
      %s29 = sphi 0, %s27
      %s41 = sphi 0, %s43
      %s44 = sphi 0, %s41
      %s45 = sphi 0, %s44
      %s61 = sphi 0, %s45
      %s69 = sphi 0, %s71
      %s72 = sphi 0, %s69
      %s73 = sphi 0, %s72
      %s89 = sphi 0, %s73
      %s97 = sphi 0, %s99
      %s100 = sphi 0, %s97
      %s101 = sphi 0, %s100
      %s117 = sphi 0, %s101
    $region4: #{tpu_custom_call.1} parent=1 // loop_header_branch
      %20 = sbr.rel (%p18) target = $region8
    $region5: #{tpu_custom_call.1} parent=1 // loop_body
      %s22 = ssub.s32 %s17, 1
      %s23 = ssub.s32 %s17, 2
      %s30 = sadd.s32 1, %s25
      %p31 = scmp.ge.s32.totalorder %s30, 1
      %s32 = scalar_select %p31, 0, %s30
      %s33 = sadd.s32 1, %s24
      %s34 = scalar_select %p31, %s33, %s24
      %p35 = scmp.ge.s32.totalorder %s34, 2
      %s36 = scalar_select %p35, 0, %s34
      %s37 = ssub.s32 %s24, %s36
      %s38 = ssub.s32 %s25, %s32
      %s39 = sor.u32 %s37, %s38
      %p40 = scmp.eq.s32.totalorder %s39, 0
      %s42 = sadd.s32 %s41, 1
      %s43 = scalar_select %p40, %s41, %s42
      %p46 = pneg %p40
      %p47 = scmp.eq.s32.totalorder %s17, 1
      %p48 = por %p46, %p47
      %p49 = scmp.ne.s32.totalorder %s41, %s44
      %p50 = scmp.eq.s32.totalorder %s17, 0
      %p51 = por %p49, %p50
      %p52 = scmp.ne.s32.totalorder %s41, %s44
      %p53 = scmp.eq.s32.totalorder %s22, 1
      %p54 = por %p52, %p53
      %p55 = scmp.ne.s32.totalorder %s44, %s45
      %p56 = scmp.eq.s32.totalorder %s22, 0
      %p57 = por %p55, %p56
      %p58 = scmp.ne.s32.totalorder %s44, %s45
      %p59 = scmp.eq.s32.totalorder %s23, 1
      %p60 = por %p58, %p59
      %p62 = scmp.ne.s32.totalorder %s45, %s61
      %p63 = scmp.eq.s32.totalorder %s23, 0
      %p64 = por %p62, %p63
      %s65 = ssub.s32 %s24, %s36
      %s66 = ssub.s32 %s25, %s32
      %s67 = sor.u32 %s65, %s66
      %p68 = scmp.eq.s32.totalorder %s67, 0
      %s70 = sadd.s32 %s69, 1
      %s71 = scalar_select %p68, %s69, %s70
      %p74 = pneg %p68
      %p75 = scmp.eq.s32.totalorder %s17, 1
      %p76 = por %p74, %p75
      %p77 = scmp.ne.s32.totalorder %s69, %s72
      %p78 = scmp.eq.s32.totalorder %s17, 0
      %p79 = por %p77, %p78
      %p80 = scmp.ne.s32.totalorder %s69, %s72
      %p81 = scmp.eq.s32.totalorder %s22, 1
      %p82 = por %p80, %p81
      %p83 = scmp.ne.s32.totalorder %s72, %s73
      %p84 = scmp.eq.s32.totalorder %s22, 0
      %p85 = por %p83, %p84
      %p86 = scmp.ne.s32.totalorder %s72, %s73
      %p87 = scmp.eq.s32.totalorder %s23, 1
      %p88 = por %p86, %p87
      %p90 = scmp.ne.s32.totalorder %s73, %s89
      %p91 = scmp.eq.s32.totalorder %s23, 0
      %p92 = por %p90, %p91
      %s93 = ssub.s32 %s24, %s36
      %s94 = ssub.s32 %s25, %s32
      %s95 = sor.u32 %s93, %s94
      %p96 = scmp.eq.s32.totalorder %s95, 0
      %s98 = sadd.s32 %s97, 1
      %s99 = scalar_select %p96, %s97, %s98
      %p102 = pneg %p96
      %p103 = scmp.eq.s32.totalorder %s17, 1
      %p104 = por %p102, %p103
      %p105 = scmp.ne.s32.totalorder %s97, %s100
      %p106 = scmp.eq.s32.totalorder %s17, 0
      %p107 = por %p105, %p106
      %p108 = scmp.ne.s32.totalorder %s97, %s100
      %p109 = scmp.eq.s32.totalorder %s22, 1
      %p110 = por %p108, %p109
      %p111 = scmp.ne.s32.totalorder %s100, %s101
      %p112 = scmp.eq.s32.totalorder %s22, 0
      %p113 = por %p111, %p112
      %p114 = scmp.ne.s32.totalorder %s100, %s101
      %p115 = scmp.eq.s32.totalorder %s23, 1
      %p116 = por %p114, %p115
      %p118 = scmp.ne.s32.totalorder %s101, %s117
      %p119 = scmp.eq.s32.totalorder %s23, 0
      %p120 = por %p118, %p119
      %p121 = scmp.le.s32.totalorder 1, %s17
      %p122 = scmp.lt.s32.totalorder %s17, 3
      %p123 = pnand %p121, %p122
      %p124 = pneg %p123
      // Predicated region
      $region9: #{tpu_custom_call.1} parent=5 // pred_check
        _
      $region10: #{tpu_custom_call.1} parent=5 // pred_check_branch
        %126 = sbr.rel (%p123) target = $region12
      $region11: #{tpu_custom_call.1} parent=5 // pred_region
        %s127 = ssub.s32 %s17, 1
      $region12: #{tpu_custom_call.1} parent=5 // pred_fallthru
        _
      %p128 = scmp.lt.s32.totalorder %s17, 2
      // Predicated region
      $region13: #{tpu_custom_call.1} parent=5 // pred_check
        %p129 = pneg %p128
      $region14: #{tpu_custom_call.1} parent=5 // pred_check_branch
        %131 = sbr.rel (%p129) target = $region16
      $region15: #{tpu_custom_call.1} parent=5 // pred_region
        // Predicated region
        $region17: #{tpu_custom_call.1} parent=15 // pred_check
          %p132 = pneg %p51
        $region18: #{tpu_custom_call.1} parent=15 // pred_check_branch
          %134 = sbr.rel (%p132) target = $region20
        $region19: #{tpu_custom_call.1} parent=15 // pred_region
          %s135 = sand.u32 %s41, 1
          %s136 = scalar_lea.sflag [#allocation3], %s135
          %s137 = sand.u32 %s41, 1
          %s138 = smul.addr %s137, 8
          %s139 = scalar_lea.vmem [#allocation2], %s138
          %s140 = smul.u32 2, %s25
          %s142 = ssub.s32 128, 128
          %143 = vsyncadd %s136, %s142
          %s144 = smul.addr %s24, 2
          %s145 = sadd.s32 %s140, %s144
          %s146 = smul.addr %s145, 64
          %s147 = scalar_lea.hbm %s0, %s146
          %s149 = sshll.u32 %s139, 4
          %s150 = int_to_ptr.vmem [resolvable:$true] %s149
          %152 = dma.hbm_to_vmem [thread:$0]  %s147, 128, %s150, %s136
        $region20: #{tpu_custom_call.1} parent=15 // pred_fallthru
          _
        // Predicated region
        $region21: #{tpu_custom_call.1} parent=15 // pred_check
          %p153 = pneg %p79
        $region22: #{tpu_custom_call.1} parent=15 // pred_check_branch
          %155 = sbr.rel (%p153) target = $region24
        $region23: #{tpu_custom_call.1} parent=15 // pred_region
          %s156 = sand.u32 %s69, 1
          %s157 = scalar_lea.sflag [#allocation6], %s156
          %s158 = sand.u32 %s69, 1
          %s159 = smul.addr %s158, 2
          %s160 = scalar_lea.vmem [#allocation5], %s159
          %s161 = smul.u32 2, %s25
          %s163 = ssub.s32 32, 32
          %164 = vsyncadd %s157, %s163
          %s165 = smul.addr %s24, 2
          %s166 = sadd.s32 %s161, %s165
          %s167 = smul.addr %s166, 16
          %s168 = scalar_lea.hbm %s1, %s167
          %s170 = sshll.u32 %s160, 4
          %s171 = int_to_ptr.vmem [resolvable:$true] %s170
          %173 = dma.hbm_to_vmem [thread:$0]  %s168, 32, %s171, %s157
        $region24: #{tpu_custom_call.1} parent=15 // pred_fallthru
          _
      $region16: #{tpu_custom_call.1} parent=5 // pred_fallthru
        _
      %p174 = scmp.le.s32.totalorder 1, %s17
      %p175 = scmp.lt.s32.totalorder %s17, 3
      %p176 = pnand %p174, %p175
      %p177 = pneg %p176
      // Predicated region
      $region25: #{tpu_custom_call.1} parent=5 // pred_check
        _
      $region26: #{tpu_custom_call.1} parent=5 // pred_check_branch
        %179 = sbr.rel (%p176) target = $region28
      $region27: #{tpu_custom_call.1} parent=5 // pred_region
        %s180 = ssub.s32 %s17, 1
        %s181 = sand.u32 %s44, 1
        %s182 = scalar_lea.sflag [#allocation3], %s181
        %s183 = sand.u32 %s44, 1
        %s184 = smul.addr %s183, 8
        %s185 = scalar_lea.vmem [#allocation2], %s184
        // Predicated region
        $region29: #{tpu_custom_call.1} parent=27 // pred_check
          %p186 = pneg %p57
        $region30: #{tpu_custom_call.1} parent=27 // pred_check_branch
          %188 = sbr.rel (%p186) target = $region32
        $region31: #{tpu_custom_call.1} parent=27 // pred_region
          %189 = dma.done %s182, 128
        $region32: #{tpu_custom_call.1} parent=27 // pred_fallthru
          _
        %s190 = sand.u32 %s72, 1
        %s191 = scalar_lea.sflag [#allocation6], %s190
        %s192 = sand.u32 %s72, 1
        %s193 = smul.addr %s192, 2
        %s194 = scalar_lea.vmem [#allocation5], %s193
        // Predicated region
        $region33: #{tpu_custom_call.1} parent=27 // pred_check
          %p195 = pneg %p85
        $region34: #{tpu_custom_call.1} parent=27 // pred_check_branch
          %197 = sbr.rel (%p195) target = $region36
        $region35: #{tpu_custom_call.1} parent=27 // pred_region
          %198 = dma.done %s191, 32
        $region36: #{tpu_custom_call.1} parent=27 // pred_fallthru
          _
        %s199 = sand.u32 %s44, 1
        %s200 = scalar_lea.sflag [#allocation3], %s199
        %s201 = sand.u32 %s44, 1
        %s202 = smul.addr %s201, 8
        %s203 = scalar_lea.vmem [#allocation2], %s202
        %p204 = pneg %p57
        %p205 = pneg %p54
        %s206 = sand.u32 %s72, 1
        %s207 = scalar_lea.sflag [#allocation6], %s206
        %s208 = sand.u32 %s72, 1
        %s209 = smul.addr %s208, 2
        %s210 = scalar_lea.vmem [#allocation5], %s209
        %p211 = pneg %p85
        %p212 = pneg %p82
        %p213 = pneg %p113
        %p214 = pneg %p110
        %s215 = sand.u32 %s100, 1
        %s216 = scalar_lea.sflag [#allocation4], %s215
        %s217 = sand.u32 %s100, 1
        %s218 = smul.addr %s217, 2
        %s219 = scalar_lea.vmem [#allocation7], %s218
        %s220 = smul.u32 2, %s27
        %s221 = smul.u32 2, %s27
        %s222 = smul.u32 2, %s27
        %v223 = vld [vmem:[%s185] sm:$0xff]
        %v224 = vld [vmem:[%s194] sm:$0x3]
        %v226 = vcombine.high %v223, %v223
        %vm228 = vcmask 1043456
        %v229 = vsel %vm228, %v223, -inf
        %v230 = vrot.slane %v229, 4
        %v231 = vmax.f32 %v229, %v230
        %v232 = vrot.slane %v231, 2
        %v233 = vmax.f32 %v231, %v232
        %v234 = vrot.slane %v233, 1
        %v235 = vmax.f32 %v233, %v234
        %v236 = vsel %vm228, %v226, -inf
        %v237 = vrot.slane %v236, 4
        %v238 = vmax.f32 %v236, %v237
        %v239 = vrot.slane %v238, 2
        %v240 = vmax.f32 %v238, %v239
        %v241 = vrot.slane %v240, 1
        %v242 = vmax.f32 %v240, %v241
        %v245 = vcombine.low %v235, %v242
        %v247 = vsub.f32 %v223, %v245
        %v248 = vmul.f32 %v247, 1.442695
        %v249 = vpow.pop %v248
        %v251 = vcombine.high %v249, %v249
        %v253 = vsel %vm228, %v249, 0.0
        %v254 = vrot.slane %v253, 4
        %v255 = vadd.f32 %v253, %v254
        %v256 = vrot.slane %v255, 2
        %v257 = vadd.f32 %v255, %v256
        %v258 = vrot.slane %v257, 1
        %v259 = vadd.f32 %v257, %v258
        %v260 = vsel %vm228, %v251, 0.0
        %v261 = vrot.slane %v260, 4
        %v262 = vadd.f32 %v260, %v261
        %v263 = vrot.slane %v262, 2
        %v264 = vadd.f32 %v262, %v263
        %v265 = vrot.slane %v264, 1
        %v266 = vadd.f32 %v264, %v265
        %v267 = vlaneseq
        %v268 = vshrl.u32 %v267, 7
        %v269 = vlaneseq
        %v270 = vshrl.u32 %v269, 7
        %v271 = vsub.s32 0, %v270
        %v272 = vrot.slane %v224, %v271
        %v273 = vlaneseq
        %v274 = vshrl.u32 %v273, 7
        %v275 = vsub.s32 1, %v274
        %v276 = vrot.slane %v224, %v275
        %vm277 = vcmp.eq.s32.totalorder %v268, %v272
        %vm278 = vcmp.eq.s32.totalorder %v268, %v276
        %v280 = vcombine.high %v247, %v247
        %v282 = vsel %vm277, %v247, 0.0
        %v283 = vsel %vm278, %v280, 0.0
        %v284 = vsel %vm228, %v282, 0.0
        %v285 = vrot.slane %v284, 4
        %v286 = vadd.f32 %v284, %v285
        %v287 = vrot.slane %v286, 2
        %v288 = vadd.f32 %v286, %v287
        %v289 = vrot.slane %v288, 1
        %v290 = vadd.f32 %v288, %v289
        %v291 = vsel %vm228, %v283, 0.0
        %v292 = vrot.slane %v291, 4
        %v293 = vadd.f32 %v291, %v292
        %v294 = vrot.slane %v293, 2
        %v295 = vadd.f32 %v293, %v294
        %v296 = vrot.slane %v295, 1
        %v297 = vadd.f32 %v295, %v296
        %vm298 = vcmp.ne.s32.totalorder %v224, 255
        %v299 = vlog2.pop %v259
        %v300 = vmul.f32 %v299, 0.6931472
        %v301 = vlog2.pop %v266
        %v302 = vmul.f32 %v301, 0.6931472
        %v303 = vsub.f32 %v300, %v290
        %v304 = vsub.f32 %v302, %v297
        %v307 = vcombine.low %v303, %v304
        %v309 = vunpack.c.l.s4 1966171168
        %v310 = vunpack.c.0.s8 %v309
        %v311 = vlaneseq
        %v312 = vshrl.u32 %v311, 7
        %v313 = vsub.s32 %v310, %v312
        %v314 = vrot.slane %v307, %v313
        %v316 = vunpack.c.l.s4 1966171168
        %v317 = vunpack.c.0.s8 %v316
        %v318 = vlaneseq
        %v319 = vshrl.u32 %v318, 7
        %v320 = vsub.s32 %v317, %v319
        %v321 = vrot.slane %v314, %v320
        %v323 = vsel %vm298, %v321, 0.0
        %v324 = vlaneseq
        %vm325 = vcmp.ge.s32.totalorder %v324, 0
        %vm326 = vcmp.lt.s32.totalorder %v324, 256
        %vm327 = vmand %vm325, %vm326
        %328 = vst.msk [vmem:[%s219] sm:$0x3] %vm327, %v323
        %s329 = sand.u32 %s100, 1
        %s330 = scalar_lea.sflag [#allocation4], %s329
        %s331 = sand.u32 %s100, 1
        %s332 = smul.addr %s331, 2
        %s333 = scalar_lea.vmem [#allocation7], %s332
        // Predicated region
        $region37: #{tpu_custom_call.1} parent=27 // pred_check
          %p334 = pneg %p110
        $region38: #{tpu_custom_call.1} parent=27 // pred_check_branch
          %336 = sbr.rel (%p334) target = $region40
        $region39: #{tpu_custom_call.1} parent=27 // pred_region
          %s337 = smul.u32 2, %s27
          %s339 = ssub.s32 32, 32
          %340 = vsyncadd %s330, %s339
          %s341 = smul.addr %s26, 2
          %s342 = sadd.s32 %s337, %s341
          %s343 = smul.addr %s342, 16
          %s344 = scalar_lea.hbm %s2, %s343
          %s346 = sshll.u32 %s333, 4
          %s347 = int_to_ptr.vmem [resolvable:$true] %s346
          %349 = dma.vmem_to_hbm [thread:$0]  %s347, 32, %s344, %s330
        $region40: #{tpu_custom_call.1} parent=27 // pred_fallthru
          _
      $region28: #{tpu_custom_call.1} parent=5 // pred_fallthru
        _
      %p350 = scmp.le.s32.totalorder 2, %s17
      // Predicated region
      $region41: #{tpu_custom_call.1} parent=5 // pred_check
        %p351 = pneg %p350
      $region42: #{tpu_custom_call.1} parent=5 // pred_check_branch
        %353 = sbr.rel (%p351) target = $region44
      $region43: #{tpu_custom_call.1} parent=5 // pred_region
        %s354 = ssub.s32 %s17, 2
        // Predicated region
        $region45: #{tpu_custom_call.1} parent=43 // pred_check
          %p355 = pneg %p116
        $region46: #{tpu_custom_call.1} parent=43 // pred_check_branch
          %357 = sbr.rel (%p355) target = $region48
        $region47: #{tpu_custom_call.1} parent=43 // pred_region
          %s358 = sand.u32 %s101, 1
          %s359 = scalar_lea.sflag [#allocation4], %s358
          %s360 = sand.u32 %s101, 1
          %s361 = smul.addr %s360, 2
          %s362 = scalar_lea.vmem [#allocation7], %s361
          %363 = dma.done %s359, 32
        $region48: #{tpu_custom_call.1} parent=43 // pred_fallthru
          _
      $region44: #{tpu_custom_call.1} parent=5 // pred_fallthru
        _
    $region6: #{tpu_custom_call.1} parent=1 // loop_footer
      %s21 = sadd.s32 1, %s17
    $region7: #{tpu_custom_call.1} parent=1 // loop_footer_branch
      %16 = sbr.rel target = $region3
    $region8: #{tpu_custom_call.1} parent=1 // loop_exit
      _
    %364 = vsyncpa [#allocation3], 1
    %s365 = scalar_lea.sflag [#allocation3], 1
    %366 = vsyncpa %s365, 1
    %367 = vsyncpa [#allocation6], 1
    %s368 = scalar_lea.sflag [#allocation6], 1
    %369 = vsyncpa %s368, 1
    %370 = vsyncpa [#allocation4], 1
    %s371 = scalar_lea.sflag [#allocation4], 1
    %372 = vsyncpa %s371, 1

</llo_original>
